<compile_context>
chip_gen: v5e
topology: v5e:2x2
jax: 0.10.0
libtpu: 0.0.40
codegen_flags: <defaults>
</compile_context>

<pallas_src>
import functools

import jax
import jax.numpy as jnp
from jax import lax
from jax.experimental import pallas as pl
from jax.experimental.pallas import tpu as pltpu


# ----------------------------------------------------------------------------
# config / helpers
# ----------------------------------------------------------------------------
BLOCK_N = 512                       # lane-dense N tile (feedback: 512, cdiv grid)
# 48 MiB scoped VMEM: safely under v7x's 64 MiB physical, above v5e's 16 MiB
# default; actual double-buffered footprint of these kernels is ~5-10 MiB.
VMEM_LIMIT = 48 * 1024 * 1024


def _ceil_to(x, m):
    return (x + m - 1) // m * m


# ----------------------------------------------------------------------------
# Kernel A: z = (x @ w) * scale, fused with row logsumexp over valid columns.
#   x : (Mp, K) bf16   w : (K, Np) bf16 (pre-transposed, zero-padded em)
#   outputs: z (Mp, Np) f32, lse (Mp, 128) f32 lane-dense slab (lane 0 used)
# ----------------------------------------------------------------------------
def _logits_lse_kernel(x_ref, w_ref, z_ref, lse_ref, m_sc, l_sc,
                       *, scale, valid_n, block_n):
    j = pl.program_id(1)
    nj = pl.num_programs(1)

    @pl.when(j == 0)
    def _():
        m_sc[...] = jnp.full_like(m_sc, -jnp.inf)
        l_sc[...] = jnp.zeros_like(l_sc)

    z = jnp.dot(x_ref[...], w_ref[...],
                preferred_element_type=jnp.float32) * scale
    z_ref[...] = z

    if valid_n % block_n != 0:
        # Pad columns only exist in the final N tile (pad < block_n, so a tile
        # is never fully masked and the running max stays finite).
        col = j * block_n + lax.broadcasted_iota(jnp.int32, z.shape, 1)
        z = jnp.where(col < valid_n, z, -jnp.inf)

    m_prev = m_sc[...]
    m_new = jnp.maximum(m_prev, jnp.max(z, axis=1, keepdims=True))
    l_sc[...] = (jnp.exp(m_prev - m_new) * l_sc[...]
                 + jnp.sum(jnp.exp(z - m_new), axis=1, keepdims=True))
    m_sc[...] = m_new

    @pl.when(j == nj - 1)
    def _():
        lse_ref[...] = jnp.broadcast_to(m_sc[...] + jnp.log(l_sc[...]),
                                        lse_ref.shape)


def logits_lse(x, w_bf, *, valid_n, scale=1.0, block_n=BLOCK_N):
    """Fused (x @ w_bf) * scale and row-logsumexp over the first valid_n cols.

    x: (M, K) float; w_bf: (K, Np) bf16 with Np % block_n == 0 (pad cols zero).
    Returns (z_pad (Mp, Np) f32, lse (Mp,) f32); rows >= M are padding.
    """
    M, K = x.shape
    K2, Np = w_bf.shape
    assert K == K2 and Np % block_n == 0 and Np >= valid_n

    Mp = _ceil_to(M, 16)                       # bf16 sublane packing
    tm = Mp if Mp <= 512 else 256
    Mp = _ceil_to(Mp, tm)

    x_bf = x.astype(jnp.bfloat16)
    if Mp != M:
        x_bf = jnp.pad(x_bf, ((0, Mp - M), (0, 0)))

    grid = (Mp // tm, Np // block_n)           # (parallel, arbitrary)
    flops = 2 * Mp * Np * K
    bytes_accessed = (Mp * K * 2 + (Mp // tm) * K * Np * 2
                      + Mp * Np * 4 + Mp * 128 * 4)

    z, lse = pl.pallas_call(
        functools.partial(_logits_lse_kernel, scale=scale,
                          valid_n=valid_n, block_n=block_n),
        grid=grid,
        in_specs=[pl.BlockSpec((tm, K), lambda i, j: (i, 0)),
                  pl.BlockSpec((K, block_n), lambda i, j: (0, j))],
        out_specs=[pl.BlockSpec((tm, block_n), lambda i, j: (i, j)),
                   pl.BlockSpec((tm, 128), lambda i, j: (i, 0))],
        out_shape=[jax.ShapeDtypeStruct((Mp, Np), jnp.float32),
                   jax.ShapeDtypeStruct((Mp, 128), jnp.float32)],
        scratch_shapes=[pltpu.VMEM((tm, 1), jnp.float32),    # running max
                        pltpu.VMEM((tm, 1), jnp.float32)],   # running sumexp
        compiler_params=pltpu.CompilerParams(
            dimension_semantics=("parallel", "arbitrary"),
            vmem_limit_bytes=VMEM_LIMIT),
        cost_estimate=pl.CostEstimate(flops=flops, transcendentals=Mp * Np,
                                      bytes_accessed=bytes_accessed),
    )(x_bf, w_bf)
    # TODO(synk): the cross-entropy branch could skip writing the dense z
    # output entirely by gathering the target column in-kernel via
    # scalar-prefetched targets.
    return z, lse[:, 0]


# ----------------------------------------------------------------------------
# Kernel B: fused em_knn @ em.T with a "strictly greater than threshold" count
# epilogue.  Whole M fits in one tile -> em streamed from HBM exactly once;
# the (M, C) similarity matrix is never materialized.
# ----------------------------------------------------------------------------
def _recip_count_kernel(x_ref, w_ref, thr_ref, top1_ref, cnt_ref, acc_sc,
                        *, valid_n, block_n):
    j = pl.program_id(0)

    @pl.when(j == 0)
    def _():
        acc_sc[...] = jnp.zeros_like(acc_sc)

    s = jnp.dot(x_ref[...], w_ref[...], preferred_element_type=jnp.float32)
    col = j * block_n + lax.broadcasted_iota(jnp.int32, s.shape, 1)
    # Exclude pad columns and the query-top1 column itself (protects against
    # bf16/f32 rounding mismatch with the externally computed threshold).
    ok = (col < valid_n) & (col != top1_ref[...])
    gt = (ok & (s > thr_ref[...])).astype(jnp.float32)
    acc_sc[...] += jnp.sum(gt, axis=1, keepdims=True)

    @pl.when(j == pl.num_programs(0) - 1)
    def _():
        cnt_ref[...] = jnp.broadcast_to(acc_sc[...], cnt_ref.shape)


def recip_count(em_knn_bf, w_bf, thr, top1_cols, *, valid_n, block_n=BLOCK_N):
    """For each row r: count of columns c (< valid_n, c != top1_cols[r]) with
    (em_knn_bf[r] . em[:, c]) > thr[r].  Returns (M,) f32 counts."""
    M, K = em_knn_bf.shape
    K2, Np = w_bf.shape
    assert K == K2 and Np % block_n == 0

    Mp = _ceil_to(M, 16)
    x = em_knn_bf
    if Mp != M:
        x = jnp.pad(x, ((0, Mp - M), (0, 0)))
        thr = jnp.pad(thr, (0, Mp - M), constant_values=jnp.inf)
        top1_cols = jnp.pad(top1_cols, (0, Mp - M), constant_values=-1)
    thr = thr.reshape(Mp, 1).astype(jnp.float32)
    top1_cols = top1_cols.reshape(Mp, 1).astype(jnp.int32)

    cnt = pl.pallas_call(
        functools.partial(_recip_count_kernel, valid_n=valid_n, block_n=block_n),
        grid=(Np // block_n,),
        in_specs=[pl.BlockSpec((Mp, K), lambda j: (0, 0)),
                  pl.BlockSpec((K, block_n), lambda j: (0, j)),
                  pl.BlockSpec((Mp, 1), lambda j: (0, 0)),
                  pl.BlockSpec((Mp, 1), lambda j: (0, 0))],
        out_specs=pl.BlockSpec((Mp, 128), lambda j: (0, 0)),
        out_shape=jax.ShapeDtypeStruct((Mp, 128), jnp.float32),
        scratch_shapes=[pltpu.VMEM((Mp, 1), jnp.float32)],
        compiler_params=pltpu.CompilerParams(
            dimension_semantics=("arbitrary",),
            vmem_limit_bytes=VMEM_LIMIT),
    )(x, w_bf, thr, top1_cols)
    return cnt[:M, 0]


# ----------------------------------------------------------------------------
# InvNet.forward
# ----------------------------------------------------------------------------
def invnet_forward(em, inputs, targets, epoch, *, beta=0.05, knn=6,
                   ul_alpha=0.05, ul_beta=1.0, return_aux=False):
    B, Fdim = inputs.shape
    C = em.shape[0]

    # em preprocessing hoisted and SHARED by both kernels: one bf16 cast, one
    # transpose, one column pad per forward (not per matmul).
    em_bf = em.astype(jnp.bfloat16)
    Np = _ceil_to(C, BLOCK_N)
    w_bf = em_bf.T                                              # (F, C)
    if Np != C:
        w_bf = jnp.pad(w_bf, ((0, 0), (0, Np - C)))

    # ExemplarMemory forward + "/ beta" + row logsumexp fused in one kernel.
    z_pad, lse_pad = logits_lse(inputs, w_bf, valid_n=C, scale=1.0 / beta)
    logits = z_pad[:B, :C]
    lse = lse_pad[:B]

    # NOTE: `epoch` is a Python-level static branch, exactly like the PyTorch
    # module; jitting with a traced epoch would require lax.cond.
    if knn > 0 and epoch >= 5:
        k = knn
        _, idx_topk = lax.top_k(logits, k)                      # (B, k)
        top1 = idx_topk[:, 0]
        idx_flat = idx_topk.reshape(-1)

        # TODO(synk): for very large F a scalar-prefetch DMA row-gather would
        # avoid materializing em_knn in HBM; for typical F the XLA take is ok.
        em_knn_bf = jnp.take(em_bf, idx_flat, axis=0)           # (B*k, F) bf16
        em_top1_bf = jnp.take(em_bf, top1, axis=0)              # (B, F) bf16

        # Per-neighbor threshold: sim(em[neigh], em[top1]), f32-accumulated
        # over the same bf16 operands the kernel uses.
        thr = jnp.einsum(
            "nkf,nf->nk",
            em_knn_bf.reshape(B, k, Fdim).astype(jnp.float32),
            em_top1_bf.astype(jnp.float32)).reshape(B * k)
        top1_cols = jnp.broadcast_to(top1[:, None], (B, k)).reshape(B * k)

        # k-reciprocal test fused into the sims matmul (no (B*k, C) in HBM,
        # no XLA sort over C): reciprocal iff fewer than k classes are
        # strictly more similar to the neighbor than the query's top-1 class.
        counts = recip_count(em_knn_bf, w_bf, thr, top1_cols, valid_n=C)
        recip = (counts < k).reshape(B, k)

        # Sparse smooth_hot targets: 3/k at reciprocal top-k columns, 1.0 at
        # the target column (duplicate top-k entry zeroed => overwrite).
        w_topk = jnp.where(recip & (idx_topk != targets[:, None]), 3.0 / k, 0.0)
        cols = jnp.concatenate([idx_topk, targets[:, None]], axis=1)   # (B, k+1)
        vals = jnp.concatenate([w_topk, jnp.ones((B, 1), jnp.float32)], axis=1)
        z_nz = jnp.take_along_axis(logits, cols, axis=1)               # (B, k+1)

        # beta_loss = mean_i sum_j -t_ij * log_softmax(logits)_ij
        beta_rows = lse * vals.sum(axis=1) - (vals * z_nz).sum(axis=1)
        beta_loss = beta_rows.mean()

        # alpha_loss = mean_i -sum_j softmax_ij * log(where(t==0, 1e-4, t))_ij
        log_eps = jnp.log(jnp.float32(1e-4))
        p_nz = jnp.exp(z_nz - lse[:, None])
        safe_vals = jnp.where(vals > 0, vals, 1.0)
        corr = jnp.where(vals > 0, p_nz * (jnp.log(safe_vals) - log_eps), 0.0)
        alpha_rows = -(corr.sum(axis=1) + log_eps)
        alpha_loss = alpha_rows.mean()

        out = (ul_alpha * alpha_loss, ul_beta * beta_loss)
        if return_aux:
            return out + ({"logits": logits, "lse": lse, "idx_topk": idx_topk,
                           "recip": recip, "counts": counts},)
        return out
    else:
        # F.cross_entropy = mean_i (lse_i - logit_{i, target_i})
        z_t = jnp.take_along_axis(logits, targets[:, None], axis=1)[:, 0]
        ce = (lse - z_t).mean()
        out = (jnp.float32(0.0), ce)
        if return_aux:
            return out + ({"logits": logits, "lse": lse},)
        return out


# ----------------------------------------------------------------------------
# self-test
# ----------------------------------------------------------------------------
if __name__ == "__main__":
    key = jax.random.PRNGKey(0)
    B, F, C = 8, 128, 256            # batch, num_features, num_classes
    k_inp, k_em, k_tgt = jax.random.split(key, 3)

    inputs = jax.random.normal(k_inp, (B, F), jnp.float32)
    inputs = inputs / jnp.linalg.norm(inputs, axis=1, keepdims=True)
    # em is nn.Parameter(zeros) in the module; use row-normalized randoms so
    # the kNN / softmax path is non-degenerate (mirrors post-update memory).
    em = jax.random.normal(k_em, (C, F), jnp.float32)
    em = em / jnp.linalg.norm(em, axis=1, keepdims=True)
    targets = jax.random.randint(k_tgt, (B,), 0, C)

    beta, knn = 0.05, 6

    # --- unit check: fused matmul + logsumexp kernel ---
    em_bf = em.astype(jnp.bfloat16)
    Np = _ceil_to(C, BLOCK_N)
    w_bf = em_bf.T
    if Np != C:
        w_bf = jnp.pad(w_bf, ((0, 0), (0, Np - C)))
    z_pad, lse_pad = logits_lse(inputs, w_bf, valid_n=C, scale=1.0 / beta)
    logits = z_pad[:B, :C]
    lse = lse_pad[:B]
    logits_ref = (inputs.astype(jnp.bfloat16).astype(jnp.float32)
                  @ em_bf.astype(jnp.float32).T) / beta
    assert bool(jnp.allclose(logits, logits_ref, atol=0.2, rtol=2e-2))
    assert bool(jnp.allclose(lse, jax.nn.logsumexp(logits, axis=1),
                             atol=1e-3, rtol=1e-5))

    # --- unit check: fused reciprocal-count kernel ---
    _, idx_topk = lax.top_k(logits, knn)
    top1 = idx_topk[:, 0]
    em_knn_bf = jnp.take(em_bf, idx_topk.reshape(-1), axis=0)
    em_top1_bf = jnp.take(em_bf, top1, axis=0)
    thr = jnp.einsum("nkf,nf->nk",
                     em_knn_bf.reshape(B, knn, F).astype(jnp.float32),
                     em_top1_bf.astype(jnp.float32)).reshape(-1)
    top1_cols = jnp.broadcast_to(top1[:, None], (B, knn)).reshape(-1)
    counts = recip_count(em_knn_bf, w_bf, thr, top1_cols, valid_n=C)
    sims_ref = em_knn_bf.astype(jnp.float32) @ em_bf.astype(jnp.float32).T
    colr = jnp.arange(C)[None, :]
    counts_ref = jnp.sum((sims_ref > thr[:, None]) & (colr != top1_cols[:, None]),
                         axis=1).astype(jnp.float32)
    # MXU vs XLA accumulation order may flip a hair-breadth comparison; <=1.
    assert int(jnp.max(jnp.abs(counts - counts_ref))) <= 1

    # --- full forward, knn branch (epoch >= 5), vs dense smooth_hot algebra ---
    alpha_loss, beta_loss, aux = invnet_forward(em, inputs, targets, epoch=6,
                                                beta=beta, knn=knn,
                                                return_aux=True)
    jax.block_until_ready((alpha_loss, beta_loss))
    assert bool(jnp.isfinite(alpha_loss)) and bool(jnp.isfinite(beta_loss))

    lg, ls, recip, idx = aux["logits"], aux["lse"], aux["recip"], aux["idx_topk"]
    rows = jnp.arange(B)[:, None]
    t_dense = jnp.zeros((B, C), jnp.float32)
    t_dense = t_dense.at[rows, idx].set(jnp.where(recip, 3.0 / knn, 0.0))
    t_dense = t_dense.at[jnp.arange(B), targets].set(1.0)
    logp = lg - ls[:, None]
    beta_ref = jnp.mean(jnp.sum(-t_dense * logp, axis=1))
    t_re = jnp.where(t_dense == 0.0, 1e-4, t_dense)
    alpha_ref = jnp.mean(jnp.sum(-jnp.exp(logp) * jnp.log(t_re), axis=1))
    assert bool(jnp.allclose(beta_loss, 1.0 * beta_ref, atol=5e-3, rtol=1e-4))
    assert bool(jnp.allclose(alpha_loss, 0.05 * alpha_ref, atol=5e-3, rtol=1e-4))

    # --- full forward, cross-entropy branch (epoch < 5) ---
    zero, ce = invnet_forward(em, inputs, targets, epoch=1, beta=beta, knn=knn)
    jax.block_until_ready((zero, ce))
    ce_ref = jnp.mean(ls - lg[jnp.arange(B), targets])
    assert bool(jnp.allclose(ce, ce_ref, atol=1e-5, rtol=1e-5))

    print("KERNEL_OK")
</pallas_src>

<mosaic_0001>
module attributes {stable_mosaic.version = 11 : i64} {
  func.func @_logits_lse_kernel(%arg0: i32, %arg1: i32, %arg2: memref<16x128xbf16, #tpu.memory_space<vmem>>, %arg3: memref<128x512xbf16, #tpu.memory_space<vmem>>, %arg4: memref<16x512xf32, #tpu.memory_space<vmem>>, %arg5: memref<16x128xf32, #tpu.memory_space<vmem>>, %arg6: memref<16x1xf32, #tpu.memory_space<vmem>>, %arg7: memref<16x1xf32, #tpu.memory_space<vmem>>) attributes {dimension_semantics = [#tpu.dimension_semantics<parallel>, #tpu.dimension_semantics<arbitrary>], iteration_bounds = array<i64: 1, 1>, scalar_prefetch = 0 : i64, scratch_operands = 2 : i64, tpu.core_type = #tpu.core_type<tc>, window_params = [{transform_indices = @transform_0, window_bounds = array<i64: 16, 128>}, {transform_indices = @transform_1, window_bounds = array<i64: 128, 512>}, {transform_indices = @transform_2, window_bounds = array<i64: 16, 512>}, {transform_indices = @transform_3, window_bounds = array<i64: 16, 128>}]} {
    %c0_i32 = arith.constant 0 : i32
    %0 = arith.cmpi eq, %arg1, %c0_i32 : i32
    %1 = arith.extui %0 : i1 to i32
    %c0_i32_0 = arith.constant 0 : i32
    %2 = arith.cmpi ne, %1, %c0_i32_0 : i32
    scf.if %2 {
      %cst_20 = arith.constant 0xFF800000 : f32
      %36 = vector.broadcast %cst_20 : f32 to vector<16x1xf32>
      %c0_21 = arith.constant 0 : index
      %c0_22 = arith.constant 0 : index
      %37 = vector.load %arg6[%c0_21, %c0_22] : memref<16x1xf32, #tpu.memory_space<vmem>>, vector<16x1xf32>
      tpu.vector_store %arg6[%c0_21, %c0_22], %36 {strides = array<i32>} : memref<16x1xf32, #tpu.memory_space<vmem>>, vector<16x1xf32>,
      %cst_23 = arith.constant 0.000000e+00 : f32
      %38 = vector.broadcast %cst_23 : f32 to vector<16x1xf32>
      %c0_24 = arith.constant 0 : index
      %c0_25 = arith.constant 0 : index
      %39 = vector.load %arg7[%c0_24, %c0_25] : memref<16x1xf32, #tpu.memory_space<vmem>>, vector<16x1xf32>
      tpu.vector_store %arg7[%c0_24, %c0_25], %38 {strides = array<i32>} : memref<16x1xf32, #tpu.memory_space<vmem>>, vector<16x1xf32>,
    } else {
    }
    %c0 = arith.constant 0 : index
    %c0_1 = arith.constant 0 : index
    %3 = vector.load %arg2[%c0, %c0_1] : memref<16x128xbf16, #tpu.memory_space<vmem>>, vector<16x128xbf16>
    %c0_2 = arith.constant 0 : index
    %c0_3 = arith.constant 0 : index
    %4 = vector.load %arg3[%c0_2, %c0_3] : memref<128x512xbf16, #tpu.memory_space<vmem>>, vector<128x512xbf16>
    %cst = arith.constant dense<0.000000e+00> : vector<16x512xf32>
    %5 = tpu.matmul %3, %4, %cst {dimension_numbers = #tpu.dot_dimension_numbers<[1], [0], [0], [1], [0, 0, 1, 1], [], []>} : vector<16x128xbf16>, vector<128x512xbf16>, vector<16x512xf32> -> vector<16x512xf32>
    %cst_4 = arith.constant 2.000000e+01 : f32
    %6 = vector.broadcast %cst_4 : f32 to vector<16x512xf32>
    %7 = arith.mulf %5, %6 : vector<16x512xf32>
    %c0_5 = arith.constant 0 : index
    %c0_6 = arith.constant 0 : index
    %8 = vector.load %arg4[%c0_5, %c0_6] : memref<16x512xf32, #tpu.memory_space<vmem>>, vector<16x512xf32>
    tpu.vector_store %arg4[%c0_5, %c0_6], %7 {strides = array<i32>} : memref<16x512xf32, #tpu.memory_space<vmem>>, vector<16x512xf32>,
    %c512_i32 = arith.constant 512 : i32
    %9 = arith.muli %arg1, %c512_i32 : i32
    %10 = tpu.iota {dimensions = array<i32: 1>} : vector<16x512xi32>
    %11 = vector.broadcast %9 : i32 to vector<16x512xi32>
    %12 = arith.addi %11, %10 : vector<16x512xi32>
    %c256_i32 = arith.constant 256 : i32
    %13 = vector.broadcast %c256_i32 : i32 to vector<16x512xi32>
    %14 = arith.cmpi slt, %12, %13 : vector<16x512xi32>
    %cst_7 = arith.constant 0xFF800000 : f32
    %15 = vector.broadcast %cst_7 : f32 to vector<16x512xf32>
    %16 = arith.select %14, %7, %15 : vector<16x512xi1>, vector<16x512xf32>
    %c0_8 = arith.constant 0 : index
    %c0_9 = arith.constant 0 : index
    %17 = vector.load %arg6[%c0_8, %c0_9] : memref<16x1xf32, #tpu.memory_space<vmem>>, vector<16x1xf32>
    %cst_10 = arith.constant dense<0xFF800000> : vector<16xf32>
    %18 = vector.multi_reduction <maximumf>, %16, %cst_10 [1] : vector<16x512xf32> to vector<16xf32>
    %19 = vector.shape_cast %18 : vector<16xf32> to vector<16x1xf32>
    %20 = arith.maximumf %17, %19 : vector<16x1xf32>
    %21 = arith.subf %17, %20 : vector<16x1xf32>
    %22 = math.exp %21 : vector<16x1xf32>
    %c0_11 = arith.constant 0 : index
    %c0_12 = arith.constant 0 : index
    %23 = vector.load %arg7[%c0_11, %c0_12] : memref<16x1xf32, #tpu.memory_space<vmem>>, vector<16x1xf32>
    %24 = arith.mulf %22, %23 : vector<16x1xf32>
    %25 = vector.broadcast %20 : vector<16x1xf32> to vector<16x512xf32>
    %26 = arith.subf %16, %25 : vector<16x512xf32>
    %27 = math.exp %26 : vector<16x512xf32>
    %cst_13 = arith.constant dense<0.000000e+00> : vector<16xf32>
    %28 = vector.multi_reduction <add>, %27, %cst_13 [1] : vector<16x512xf32> to vector<16xf32>
    %29 = vector.shape_cast %28 : vector<16xf32> to vector<16x1xf32>
    %30 = arith.addf %24, %29 : vector<16x1xf32>
    %c0_14 = arith.constant 0 : index
    %c0_15 = arith.constant 0 : index
    %31 = vector.load %arg7[%c0_14, %c0_15] : memref<16x1xf32, #tpu.memory_space<vmem>>, vector<16x1xf32>
    tpu.vector_store %arg7[%c0_14, %c0_15], %30 {strides = array<i32>} : memref<16x1xf32, #tpu.memory_space<vmem>>, vector<16x1xf32>,
    %c0_16 = arith.constant 0 : index
    %c0_17 = arith.constant 0 : index
    %32 = vector.load %arg6[%c0_16, %c0_17] : memref<16x1xf32, #tpu.memory_space<vmem>>, vector<16x1xf32>
    tpu.vector_store %arg6[%c0_16, %c0_17], %20 {strides = array<i32>} : memref<16x1xf32, #tpu.memory_space<vmem>>, vector<16x1xf32>,
    %c0_i32_18 = arith.constant 0 : i32
    %33 = arith.cmpi eq, %arg1, %c0_i32_18 : i32
    %34 = arith.extui %33 : i1 to i32
    %c0_i32_19 = arith.constant 0 : i32
    %35 = arith.cmpi ne, %34, %c0_i32_19 : i32
    scf.if %35 {
      %c0_20 = arith.constant 0 : index
      %c0_21 = arith.constant 0 : index
      %36 = vector.load %arg6[%c0_20, %c0_21] : memref<16x1xf32, #tpu.memory_space<vmem>>, vector<16x1xf32>
      %c0_22 = arith.constant 0 : index
      %c0_23 = arith.constant 0 : index
      %37 = vector.load %arg7[%c0_22, %c0_23] : memref<16x1xf32, #tpu.memory_space<vmem>>, vector<16x1xf32>
      %38 = math.log %37 : vector<16x1xf32>
      %39 = arith.addf %36, %38 : vector<16x1xf32>
      %40 = vector.shape_cast %39 : vector<16x1xf32> to vector<16x1xf32>
      %41 = vector.broadcast %40 : vector<16x1xf32> to vector<16x128xf32>
      %c0_24 = arith.constant 0 : index
      %c0_25 = arith.constant 0 : index
      %42 = vector.load %arg5[%c0_24, %c0_25] : memref<16x128xf32, #tpu.memory_space<vmem>>, vector<16x128xf32>
      tpu.vector_store %arg5[%c0_24, %c0_25], %41 {strides = array<i32>} : memref<16x128xf32, #tpu.memory_space<vmem>>, vector<16x128xf32>,
    } else {
    }
    return
  }
  func.func @transform_0(%arg0: i32, %arg1: i32) -> (i32, i32) {
    %c0_i32 = arith.constant 0 : i32
    %c0_i32_0 = arith.constant 0 : i32
    return %arg0, %c0_i32 : i32, i32
  }
  func.func @transform_1(%arg0: i32, %arg1: i32) -> (i32, i32) {
    %c0_i32 = arith.constant 0 : i32
    %c0_i32_0 = arith.constant 0 : i32
    return %c0_i32, %arg1 : i32, i32
  }
  func.func @transform_2(%arg0: i32, %arg1: i32) -> (i32, i32) {
    %c0_i32 = arith.constant 0 : i32
    return %arg0, %arg1 : i32, i32
  }
  func.func @transform_3(%arg0: i32, %arg1: i32) -> (i32, i32) {
    %c0_i32 = arith.constant 0 : i32
    %c0_i32_0 = arith.constant 0 : i32
    return %arg0, %c0_i32 : i32, i32
  }
}

</mosaic_0001>

<llo_original>
// kernel: tpu_custom_call.1
$region0: #{tpu_custom_call.1}
  #allocation0 [shape = 'u32[]', space=smem, size = 0x4, offset = 0x4, fixed_abs, tag = 'smem constant byte address 0x4 - core index']
  #allocation1 [shape = 'u32[72,128]{1,0:T(1,128)}', space=vmem, size = 0x9000, scoped, tag = 'internal scratch']
  #allocation2 [shape = 'f32[16,1]{1,0:T(8,128)}', space=vmem, size = 0x2000, scoped, tag = 'scratch operand']
  #allocation3 [shape = 'f32[16,1]{1,0:T(8,128)}', space=vmem, size = 0x2000, scoped, tag = 'scratch operand']
  %s0 = inlined_call_operand.hbm [shape: bf16[16,128], index: 0, kind: input, shape index: {}]
  %s1 = inlined_call_operand.hbm [shape: bf16[128,512], index: 1, kind: input, shape index: {}]
  %s2 = inlined_call_operand.hbm [shape: f32[16,512], index: 2, kind: output, shape index: {0}]
  %s3 = inlined_call_operand.hbm [shape: f32[16,128], index: 3, kind: output, shape index: {1}]
  %4 = xla_tuple %s2, %s3
  %s5 = sld [smem:[#allocation0]]
  $region42: #{tpu_custom_call.1} parent=0
    _
  %s7 = ssub.s32 1, %s5
  %s8 = scalar_select 0, %s7, %s5
  $region1: #{tpu_custom_call.1} parent=0
    #allocation4 [shape = 'u8[4096]{0}', space=vmem, size = 0x1000, scoped, tag = 'input window, operand 0, single buffered']
    #allocation5 [shape = 's32[1]{0}', space=sflag, size = 0x4, scoped, tag = 'scoped memory for tpu_custom_call.1']
    #allocation6 [shape = 's32[1]{0}', space=sflag, size = 0x4, scoped, tag = 'scoped memory for tpu_custom_call.1']
    #allocation7 [shape = 'u8[131072]{0}', space=vmem, size = 0x20000, scoped, tag = 'input window, operand 1, single buffered']
    #allocation8 [shape = 's32[1]{0}', space=sflag, size = 0x4, scoped, tag = 'scoped memory for tpu_custom_call.1']
    #allocation9 [shape = 'u8[32768]{0}', space=vmem, size = 0x8000, scoped, tag = 'output window, operand 0, single buffered']
    #allocation10 [shape = 'u8[8192]{0}', space=vmem, size = 0x2000, scoped, tag = 'output window, operand 1, single buffered']
    #allocation11 [shape = 's32[1]{0}', space=sflag, size = 0x4, scoped, tag = 'scoped memory for tpu_custom_call.1']
    %9 = vsyncpa [#allocation5], 0
    %10 = vsyncpa [#allocation8], 0
    %11 = vsyncpa [#allocation6], 0
    %12 = vsyncpa [#allocation11], 0
    // Predicated region
    $region2: #{tpu_custom_call.1} parent=1 // pred_check
      _
    $region3: #{tpu_custom_call.1} parent=1 // pred_check_branch
      %14 = sbr.rel (0) target = $region5
    $region4: #{tpu_custom_call.1} parent=1 // pred_region
      %16 = vsyncadd [#allocation5], 0
      %s17 = sshll.u32 %s0, 4
      %s18 = int_to_ptr.hbm [resolvable:$true] %s17
      %s19 = sshll.u32 [#allocation4], 4
      %s20 = int_to_ptr.vmem [resolvable:$true] %s19
      %25 = dma.hbm_to_vmem [thread:$0]  %s18, 128, %s20, [#allocation5], 64, 64, 4
    $region5: #{tpu_custom_call.1} parent=1 // pred_fallthru
      _
    // Predicated region
    $region6: #{tpu_custom_call.1} parent=1 // pred_check
      _
    $region7: #{tpu_custom_call.1} parent=1 // pred_check_branch
      %27 = sbr.rel (0) target = $region9
    $region8: #{tpu_custom_call.1} parent=1 // pred_region
      %29 = vsyncadd [#allocation8], 0
      %s30 = sshll.u32 %s1, 4
      %s31 = int_to_ptr.hbm [resolvable:$true] %s30
      %s32 = sshll.u32 [#allocation7], 4
      %s33 = int_to_ptr.vmem [resolvable:$true] %s32
      %38 = dma.hbm_to_vmem [thread:$0]  %s31, 4096, %s33, [#allocation8], 256, 256, 16
    $region9: #{tpu_custom_call.1} parent=1 // pred_fallthru
      _
    // Predicated region
    $region10: #{tpu_custom_call.1} parent=1 // pred_check
      _
    $region11: #{tpu_custom_call.1} parent=1 // pred_check_branch
      %40 = sbr.rel (0) target = $region13
    $region12: #{tpu_custom_call.1} parent=1 // pred_region
      %42 = dma.done [#allocation5], 128
    $region13: #{tpu_custom_call.1} parent=1 // pred_fallthru
      _
    // Predicated region
    $region14: #{tpu_custom_call.1} parent=1 // pred_check
      _
    $region15: #{tpu_custom_call.1} parent=1 // pred_check_branch
      %44 = sbr.rel (0) target = $region17
    $region16: #{tpu_custom_call.1} parent=1 // pred_region
      %46 = dma.done [#allocation8], 4096
    $region17: #{tpu_custom_call.1} parent=1 // pred_fallthru
      _
    %p47 = scmp.eq.s32.totalorder 0, 0
    // Predicated region
    $region18: #{tpu_custom_call.1} parent=1 // pred_check
      %p48 = pneg %p47
    $region19: #{tpu_custom_call.1} parent=1 // pred_check_branch
      %50 = sbr.rel (%p48) target = $region21
    $region20: #{tpu_custom_call.1} parent=1 // pred_region
      %vm51 = vcmask 7168
      %52 = vst.msk [vmem:[#allocation2] sm:$0xff] %vm51, -inf
      %53 = vst.msk [vmem:[#allocation2 + $0x8] sm:$0xff] %vm51, -inf
      %54 = vst.msk [vmem:[#allocation3] sm:$0xff] %vm51, 0.0
      %55 = vst.msk [vmem:[#allocation3 + $0x8] sm:$0xff] %vm51, 0.0
    $region21: #{tpu_custom_call.1} parent=1 // pred_fallthru
      _
    %v56 = vld [vmem:[#allocation4] sm:$0xf]
    %v57 = vld [vmem:[#allocation4 + $0x4] sm:$0xf]
    %v58 = vld [vmem:[#allocation7] sm:$0xff]
    %v59 = vld [vmem:[#allocation7 + $0x8] sm:$0xff]
    %v60 = vld [vmem:[#allocation7 + $0x10] sm:$0xff]
    %v61 = vld [vmem:[#allocation7 + $0x18] sm:$0xff]
    %v62 = vld [vmem:[#allocation7 + $0x20] sm:$0xff]
    %v63 = vld [vmem:[#allocation7 + $0x28] sm:$0xff]
    %v64 = vld [vmem:[#allocation7 + $0x30] sm:$0xff]
    %v65 = vld [vmem:[#allocation7 + $0x38] sm:$0xff]
    %v66 = vld [vmem:[#allocation7 + $0x40] sm:$0xff]
    %v67 = vld [vmem:[#allocation7 + $0x48] sm:$0xff]
    %v68 = vld [vmem:[#allocation7 + $0x50] sm:$0xff]
    %v69 = vld [vmem:[#allocation7 + $0x58] sm:$0xff]
    %v70 = vld [vmem:[#allocation7 + $0x60] sm:$0xff]
    %v71 = vld [vmem:[#allocation7 + $0x68] sm:$0xff]
    %v72 = vld [vmem:[#allocation7 + $0x70] sm:$0xff]
    %v73 = vld [vmem:[#allocation7 + $0x78] sm:$0xff]
    %v74 = vld [vmem:[#allocation7 + $0x80] sm:$0xff]
    %v75 = vld [vmem:[#allocation7 + $0x88] sm:$0xff]
    %v76 = vld [vmem:[#allocation7 + $0x90] sm:$0xff]
    %v77 = vld [vmem:[#allocation7 + $0x98] sm:$0xff]
    %v78 = vld [vmem:[#allocation7 + $0xa0] sm:$0xff]
    %v79 = vld [vmem:[#allocation7 + $0xa8] sm:$0xff]
    %v80 = vld [vmem:[#allocation7 + $0xb0] sm:$0xff]
    %v81 = vld [vmem:[#allocation7 + $0xb8] sm:$0xff]
    %v82 = vld [vmem:[#allocation7 + $0xc0] sm:$0xff]
    %v83 = vld [vmem:[#allocation7 + $0xc8] sm:$0xff]
    %v84 = vld [vmem:[#allocation7 + $0xd0] sm:$0xff]
    %v85 = vld [vmem:[#allocation7 + $0xd8] sm:$0xff]
    %v86 = vld [vmem:[#allocation7 + $0xe0] sm:$0xff]
    %v87 = vld [vmem:[#allocation7 + $0xe8] sm:$0xff]
    %v88 = vld [vmem:[#allocation7 + $0xf0] sm:$0xff]
    %v89 = vld [vmem:[#allocation7 + $0xf8] sm:$0xff]
    %v92 = vunpack.c.l.b16 %v56
    %v93 = vunpack.c.l.b16 %v57
    %v94 = vpack.c.b16 %v93, %v92
    %v128 = vunpack.c.l.b16 %v58
    %v129 = vunpack.c.h.b16 %v58
    %v130 = vunpack.c.l.b16 %v59
    %v131 = vunpack.c.h.b16 %v59
    %v132 = vunpack.c.l.b16 %v60
    %v133 = vunpack.c.h.b16 %v60
    %v134 = vunpack.c.l.b16 %v61
    %v135 = vunpack.c.h.b16 %v61
    %v136 = vunpack.c.l.b16 %v62
    %v137 = vunpack.c.h.b16 %v62
    %v138 = vunpack.c.l.b16 %v63
    %v139 = vunpack.c.h.b16 %v63
    %v140 = vunpack.c.l.b16 %v64
    %v141 = vunpack.c.h.b16 %v64
    %v142 = vunpack.c.l.b16 %v65
    %v143 = vunpack.c.h.b16 %v65
    %v144 = vunpack.c.l.b16 %v66
    %v145 = vunpack.c.h.b16 %v66
    %v146 = vunpack.c.l.b16 %v67
    %v147 = vunpack.c.h.b16 %v67
    %v148 = vunpack.c.l.b16 %v68
    %v149 = vunpack.c.h.b16 %v68
    %v150 = vunpack.c.l.b16 %v69
    %v151 = vunpack.c.h.b16 %v69
    %v152 = vunpack.c.l.b16 %v70
    %v153 = vunpack.c.h.b16 %v70
    %v154 = vunpack.c.l.b16 %v71
    %v155 = vunpack.c.h.b16 %v71
    %v156 = vunpack.c.l.b16 %v72
    %v157 = vunpack.c.h.b16 %v72
    %v158 = vunpack.c.l.b16 %v73
    %v159 = vunpack.c.h.b16 %v73
    %v160 = vunpack.c.l.b16 %v74
    %v161 = vunpack.c.h.b16 %v74
    %v162 = vunpack.c.l.b16 %v75
    %v163 = vunpack.c.h.b16 %v75
    %v164 = vunpack.c.l.b16 %v76
    %v165 = vunpack.c.h.b16 %v76
    %v166 = vunpack.c.l.b16 %v77
    %v167 = vunpack.c.h.b16 %v77
    %v168 = vunpack.c.l.b16 %v78
    %v169 = vunpack.c.h.b16 %v78
    %v170 = vunpack.c.l.b16 %v79
    %v171 = vunpack.c.h.b16 %v79
    %v172 = vunpack.c.l.b16 %v80
    %v173 = vunpack.c.h.b16 %v80
    %v174 = vunpack.c.l.b16 %v81
    %v175 = vunpack.c.h.b16 %v81
    %v176 = vunpack.c.l.b16 %v82
    %v177 = vunpack.c.h.b16 %v82
    %v178 = vunpack.c.l.b16 %v83
    %v179 = vunpack.c.h.b16 %v83
    %v180 = vunpack.c.l.b16 %v84
    %v181 = vunpack.c.h.b16 %v84
    %v182 = vunpack.c.l.b16 %v85
    %v183 = vunpack.c.h.b16 %v85
    %v184 = vunpack.c.l.b16 %v86
    %v185 = vunpack.c.h.b16 %v86
    %v186 = vunpack.c.l.b16 %v87
    %v187 = vunpack.c.h.b16 %v87
    %v188 = vunpack.c.l.b16 %v88
    %v189 = vunpack.c.h.b16 %v88
    %v190 = vunpack.c.l.b16 %v89
    %v191 = vunpack.c.h.b16 %v89
    %v192 = vpack.c.b16 %v132, %v128
    %v193 = vpack.c.b16 %v133, %v129
    %v194 = vpack.c.b16 %v134, %v130
    %v195 = vpack.c.b16 %v135, %v131
    %v196 = vpack.c.b16 %v140, %v136
    %v197 = vpack.c.b16 %v141, %v137
    %v198 = vpack.c.b16 %v142, %v138
    %v199 = vpack.c.b16 %v143, %v139
    %v200 = vpack.c.b16 %v148, %v144
    %v201 = vpack.c.b16 %v149, %v145
    %v202 = vpack.c.b16 %v150, %v146
    %v203 = vpack.c.b16 %v151, %v147
    %v204 = vpack.c.b16 %v156, %v152
    %v205 = vpack.c.b16 %v157, %v153
    %v206 = vpack.c.b16 %v158, %v154
    %v207 = vpack.c.b16 %v159, %v155
    %v208 = vpack.c.b16 %v164, %v160
    %v209 = vpack.c.b16 %v165, %v161
    %v210 = vpack.c.b16 %v166, %v162
    %v211 = vpack.c.b16 %v167, %v163
    %v212 = vpack.c.b16 %v172, %v168
    %v213 = vpack.c.b16 %v173, %v169
    %v214 = vpack.c.b16 %v174, %v170
    %v215 = vpack.c.b16 %v175, %v171
    %v216 = vpack.c.b16 %v180, %v176
    %v217 = vpack.c.b16 %v181, %v177
    %v218 = vpack.c.b16 %v182, %v178
    %v219 = vpack.c.b16 %v183, %v179
    %v220 = vpack.c.b16 %v188, %v184
    %v221 = vpack.c.b16 %v189, %v185
    %v222 = vpack.c.b16 %v190, %v186
    %v223 = vpack.c.b16 %v191, %v187
    %256 = vmatpush.bf16.msra.mxu0 %v220
    %257 = vmatpush.bf16.msra.mxu0 %v216
    %258 = vmatpush.bf16.msra.mxu0 %v212
    %259 = vmatpush.bf16.msra.mxu0 %v208
    %260 = vmatpush.bf16.msra.mxu0 %v204
    %261 = vmatpush.bf16.msra.mxu0 %v200
    %262 = vmatpush.bf16.msra.mxu0 %v196
    %263 = vmatpush.bf16.msra.mxu0 %v192
    %264 = vmatmul.bf16.gmra.mxu0 %v94
    %v265 = vpop.f32.mrf.mxu0
    %v266 = vadd.f32 0.0, %v265
    %v267 = vpop.f32.mrf.mxu0
    %v268 = vadd.f32 0.0, %v267
    %269 = vdwg.mxu0
    %270 = vmatpush.bf16.msra.mxu0 %v221
    %271 = vmatpush.bf16.msra.mxu0 %v217
    %272 = vmatpush.bf16.msra.mxu0 %v213
    %273 = vmatpush.bf16.msra.mxu0 %v209
    %274 = vmatpush.bf16.msra.mxu0 %v205
    %275 = vmatpush.bf16.msra.mxu0 %v201
    %276 = vmatpush.bf16.msra.mxu0 %v197
    %277 = vmatpush.bf16.msra.mxu0 %v193
    %278 = vmatmul.bf16.gmra.mxu0 %v94
    %v279 = vpop.f32.mrf.mxu0
    %v280 = vadd.f32 0.0, %v279
    %v281 = vpop.f32.mrf.mxu0
    %v282 = vadd.f32 0.0, %v281
    %283 = vdwg.mxu0
    %284 = vmatpush.bf16.msra.mxu0 %v222
    %285 = vmatpush.bf16.msra.mxu0 %v218
    %286 = vmatpush.bf16.msra.mxu0 %v214
    %287 = vmatpush.bf16.msra.mxu0 %v210
    %288 = vmatpush.bf16.msra.mxu0 %v206
    %289 = vmatpush.bf16.msra.mxu0 %v202
    %290 = vmatpush.bf16.msra.mxu0 %v198
    %291 = vmatpush.bf16.msra.mxu0 %v194
    %292 = vmatmul.bf16.gmra.mxu0 %v94
    %v293 = vpop.f32.mrf.mxu0
    %v294 = vadd.f32 0.0, %v293
    %v295 = vpop.f32.mrf.mxu0
    %v296 = vadd.f32 0.0, %v295
    %297 = vdwg.mxu0
    %298 = vmatpush.bf16.msra.mxu0 %v223
    %299 = vmatpush.bf16.msra.mxu0 %v219
    %300 = vmatpush.bf16.msra.mxu0 %v215
    %301 = vmatpush.bf16.msra.mxu0 %v211
    %302 = vmatpush.bf16.msra.mxu0 %v207
    %303 = vmatpush.bf16.msra.mxu0 %v203
    %304 = vmatpush.bf16.msra.mxu0 %v199
    %305 = vmatpush.bf16.msra.mxu0 %v195
    %306 = vmatmul.bf16.gmra.mxu0 %v94
    %v307 = vpop.f32.mrf.mxu0
    %v308 = vadd.f32 0.0, %v307
    %v309 = vpop.f32.mrf.mxu0
    %v310 = vadd.f32 0.0, %v309
    %311 = vdwg.mxu0
    %v312 = vmul.f32 %v266, 20.0
    %v313 = vmul.f32 %v280, 20.0
    %v314 = vmul.f32 %v294, 20.0
    %v315 = vmul.f32 %v308, 20.0
    %v316 = vmul.f32 %v268, 20.0
    %v317 = vmul.f32 %v282, 20.0
    %v318 = vmul.f32 %v296, 20.0
    %v319 = vmul.f32 %v310, 20.0
    %320 = vst [vmem:[#allocation9] sm:$0xff] %v312
    %321 = vst [vmem:[#allocation9 + $0x8] sm:$0xff] %v313
    %322 = vst [vmem:[#allocation9 + $0x10] sm:$0xff] %v314
    %323 = vst [vmem:[#allocation9 + $0x18] sm:$0xff] %v315
    %324 = vst [vmem:[#allocation9 + $0x20] sm:$0xff] %v316
    %325 = vst [vmem:[#allocation9 + $0x28] sm:$0xff] %v317
    %326 = vst [vmem:[#allocation9 + $0x30] sm:$0xff] %v318
    %327 = vst [vmem:[#allocation9 + $0x38] sm:$0xff] %v319
    %s328 = smul.u32 0, 512
    %v329 = vlaneseq
    %v330 = vand.u32 %v329, 127
    %v331 = vadd.s32 %v330, 128
    %v332 = vadd.s32 %v330, 256
    %v333 = vadd.s32 %v330, 384
    %v334 = vstv %s328
    %v335 = vadd.s32 %v334, %v330
    %v336 = vadd.s32 %v334, %v331
    %v337 = vadd.s32 %v334, %v332
    %v338 = vadd.s32 %v334, %v333
    %vm339 = vcmp.lt.s32.totalorder %v335, 256
    %vm340 = vcmp.lt.s32.totalorder %v336, 256
    %vm341 = vcmp.lt.s32.totalorder %v337, 256
    %vm342 = vcmp.lt.s32.totalorder %v338, 256
    %v343 = vsel %vm339, %v312, -inf
    %v344 = vsel %vm340, %v313, -inf
    %v345 = vsel %vm341, %v314, -inf
    %v346 = vsel %vm342, %v315, -inf
    %v347 = vsel %vm339, %v316, -inf
    %v348 = vsel %vm340, %v317, -inf
    %v349 = vsel %vm341, %v318, -inf
    %v350 = vsel %vm342, %v319, -inf
    %v351 = vld [vmem:[#allocation2] sm:$0xff]
    %v352 = vld [vmem:[#allocation2 + $0x8] sm:$0xff]
    %v353 = vmax.f32 %v343, %v345
    %v354 = vmax.f32 %v344, %v346
    %v355 = vmax.f32 %v353, %v354
    %356 = vmax.xlane.f32.xlu0 %v355
    %v357 = vpop.xlane.xlu0 %356
    %v358 = vmax.f32 %v347, %v349
    %v359 = vmax.f32 %v348, %v350
    %v360 = vmax.f32 %v358, %v359
    %361 = vmax.xlane.f32.xlu0 %v360
    %v362 = vpop.xlane.xlu0 %361
    %v363 = vmax.f32 %v351, %v357
    %v364 = vmax.f32 %v352, %v362
    %v365 = vsub.f32 %v351, %v363
    %v366 = vsub.f32 %v352, %v364
    %v367 = vmul.f32 %v365, 1.442695
    %v368 = vpow.pop %v367
    %v369 = vmul.f32 %v366, 1.442695
    %v370 = vpow.pop %v369
    %v371 = vld [vmem:[#allocation3] sm:$0xff]
    %v372 = vld [vmem:[#allocation3 + $0x8] sm:$0xff]
    %v373 = vmul.f32 %v368, %v371
    %v374 = vmul.f32 %v370, %v372
    %376 = vset.pattern.permute.xlu0 0
    %377 = vperm.xlu0 %376, %v363
    %v378 = vpop.permute.xlu0 %377
    %381 = vset.pattern.permute.xlu0 0
    %382 = vperm.xlu0 %381, %v364
    %v383 = vpop.permute.xlu0 %382
    %v385 = vsub.f32 %v343, %v378
    %v386 = vsub.f32 %v344, %v378
    %v387 = vsub.f32 %v345, %v378
    %v388 = vsub.f32 %v346, %v378
    %v389 = vsub.f32 %v347, %v383
    %v390 = vsub.f32 %v348, %v383
    %v391 = vsub.f32 %v349, %v383
    %v392 = vsub.f32 %v350, %v383
    %v393 = vmul.f32 %v385, 1.442695
    %v394 = vpow.pop %v393
    %v395 = vmul.f32 %v386, 1.442695
    %v396 = vpow.pop %v395
    %v397 = vmul.f32 %v387, 1.442695
    %v398 = vpow.pop %v397
    %v399 = vmul.f32 %v388, 1.442695
    %v400 = vpow.pop %v399
    %v401 = vmul.f32 %v389, 1.442695
    %v402 = vpow.pop %v401
    %v403 = vmul.f32 %v390, 1.442695
    %v404 = vpow.pop %v403
    %v405 = vmul.f32 %v391, 1.442695
    %v406 = vpow.pop %v405
    %v407 = vmul.f32 %v392, 1.442695
    %v408 = vpow.pop %v407
    %v409 = vadd.f32 %v394, %v396
    %v410 = vadd.f32 %v409, %v398
    %v411 = vadd.f32 %v410, %v400
    %412 = vadd.xlane.f32.xlu0 %v411
    %v413 = vpop.xlane.xlu0 %412
    %v414 = vadd.f32 %v402, %v404
    %v415 = vadd.f32 %v414, %v406
    %v416 = vadd.f32 %v415, %v408
    %417 = vadd.xlane.f32.xlu0 %v416
    %v418 = vpop.xlane.xlu0 %417
    %v419 = vadd.f32 %v373, %v413
    %v420 = vadd.f32 %v374, %v418
    %vm421 = vcmask 7168
    %422 = vst.msk [vmem:[#allocation3] sm:$0xff] %vm421, %v419
    %423 = vst.msk [vmem:[#allocation3 + $0x8] sm:$0xff] %vm421, %v420
    %424 = vst.msk [vmem:[#allocation2] sm:$0xff] %vm421, %v363
    %425 = vst.msk [vmem:[#allocation2 + $0x8] sm:$0xff] %vm421, %v364
    // Predicated region
    $region22: #{tpu_custom_call.1} parent=1 // pred_check
      %p426 = pneg %p47
    $region23: #{tpu_custom_call.1} parent=1 // pred_check_branch
      %428 = sbr.rel (%p426) target = $region25
    $region24: #{tpu_custom_call.1} parent=1 // pred_region
      %v429 = vld [vmem:[#allocation2] sm:$0xff]
      %v430 = vld [vmem:[#allocation2 + $0x8] sm:$0xff]
      %v431 = vld [vmem:[#allocation3] sm:$0xff]
      %v432 = vld [vmem:[#allocation3 + $0x8] sm:$0xff]
      %v433 = vlog2.pop %v431
      %v434 = vmul.f32 %v433, 0.6931472
      %v435 = vlog2.pop %v432
      %v436 = vmul.f32 %v435, 0.6931472
      %v437 = vadd.f32 %v429, %v434
      %v438 = vadd.f32 %v430, %v436
      %440 = vset.pattern.permute.xlu0 0
      %441 = vperm.xlu0 %440, %v437
      %v442 = vpop.permute.xlu0 %441
      %445 = vset.pattern.permute.xlu0 0
      %446 = vperm.xlu0 %445, %v438
      %v447 = vpop.permute.xlu0 %446
      %449 = vst [vmem:[#allocation10] sm:$0xff] %v442
      %450 = vst [vmem:[#allocation10 + $0x8] sm:$0xff] %v447
    $region25: #{tpu_custom_call.1} parent=1 // pred_fallthru
      _
    // Predicated region
    $region26: #{tpu_custom_call.1} parent=1 // pred_check
      _
    $region27: #{tpu_custom_call.1} parent=1 // pred_check_branch
      %452 = sbr.rel (0) target = $region29
    $region28: #{tpu_custom_call.1} parent=1 // pred_region
      %454 = vsyncadd [#allocation6], 0
      %s455 = sshll.u32 [#allocation9], 4
      %s456 = int_to_ptr.vmem [resolvable:$true] %s455
      %s457 = sshll.u32 %s2, 4
      %s458 = int_to_ptr.hbm [resolvable:$true] %s457
      %463 = dma.vmem_to_hbm [thread:$0]  %s456, 1024, %s458, [#allocation6], 512, 512, 32
    $region29: #{tpu_custom_call.1} parent=1 // pred_fallthru
      _
    // Predicated region
    $region30: #{tpu_custom_call.1} parent=1 // pred_check
      _
    $region31: #{tpu_custom_call.1} parent=1 // pred_check_branch
      %465 = sbr.rel (0) target = $region33
    $region32: #{tpu_custom_call.1} parent=1 // pred_region
      %467 = vsyncadd [#allocation11], 0
      %s468 = sshll.u32 [#allocation10], 4
      %s469 = int_to_ptr.vmem [resolvable:$true] %s468
      %s470 = sshll.u32 %s3, 4
      %s471 = int_to_ptr.hbm [resolvable:$true] %s470
      %476 = dma.vmem_to_hbm [thread:$0]  %s469, 256, %s471, [#allocation11], 128, 128, 8
    $region33: #{tpu_custom_call.1} parent=1 // pred_fallthru
      _
    // Predicated region
    $region34: #{tpu_custom_call.1} parent=1 // pred_check
      _
    $region35: #{tpu_custom_call.1} parent=1 // pred_check_branch
      %478 = sbr.rel (0) target = $region37
    $region36: #{tpu_custom_call.1} parent=1 // pred_region
      %480 = dma.done [#allocation6], 1024
    $region37: #{tpu_custom_call.1} parent=1 // pred_fallthru
      _
    // Predicated region
    $region38: #{tpu_custom_call.1} parent=1 // pred_check
      _
    $region39: #{tpu_custom_call.1} parent=1 // pred_check_branch
      %482 = sbr.rel (0) target = $region41
    $region40: #{tpu_custom_call.1} parent=1 // pred_region
      %484 = dma.done [#allocation11], 256
    $region41: #{tpu_custom_call.1} parent=1 // pred_fallthru
      _
    %485 = vsyncpa [#allocation5], 1
    %486 = vsyncpa [#allocation8], 1
    %487 = vsyncpa [#allocation6], 1
    %488 = vsyncpa [#allocation11], 1

</llo_original>
